<compile_context>
chip_gen: v7x
topology: tpu7x:2x2x1
jax: 0.10.0
libtpu: 0.0.40
codegen_flags: <defaults>
</compile_context>

<pallas_src>
import jax
import jax.numpy as jnp
from jax.experimental import pallas as pl
from jax.experimental.pallas import tpu as pltpu


def _add_kernel(x1_ref, x2_ref, out_ref):
    # Only live op in the module: out = x1 + x2 (single VPU add on one vreg).
    out_ref[...] = x1_ref[...] + x2_ref[...]


def model_forward(x0, x1, x2, x3, x4, x5, x6, x7, x8, x9, x10, x11):
    """Mirrors Model.forward(...). Only x1 and x2 contribute to the return value.
    v1/v2/v3/v4 from the original module are dead code (never consumed) and are
    intentionally not computed; x3/x4 and all other args are not passed to the
    kernel so they incur no DMA traffic or VMEM footprint."""
    assert x1.shape == x2.shape, "x1 + x2 requires matching shapes"
    m, n = x1.shape

    full_spec = pl.BlockSpec((m, n), lambda: (0, 0))

    out = pl.pallas_call(
        _add_kernel,
        grid=(),
        in_specs=[full_spec, full_spec],
        out_specs=full_spec,
        out_shape=jax.ShapeDtypeStruct((m, n), jnp.float32),
    )(x1, x2)

    return out


if __name__ == "__main__":
    key = jax.random.PRNGKey(0)
    keys = jax.random.split(key, 12)
    # Module's globals use 3x3 matrices; all 12 forward args are 3x3 float32.
    xs = [jax.random.normal(keys[i], (3, 3), dtype=jnp.float32) for i in range(12)]

    result = model_forward(*xs)
    result = jax.block_until_ready(result)

    # sanity check against pure-JAX reference of the module's return value
    expected = xs[1] + xs[2]
    assert jnp.allclose(result, expected, atol=1e-6), "mismatch vs reference"

    print("KERNEL_OK")
</pallas_src>

<mosaic_0001>
module attributes {stable_mosaic.version = 11 : i64} {
  func.func @_add_kernel(%arg0: memref<3x3xf32, #tpu.memory_space<vmem>>, %arg1: memref<3x3xf32, #tpu.memory_space<vmem>>, %arg2: memref<3x3xf32, #tpu.memory_space<vmem>>) attributes {dimension_semantics = [], scalar_prefetch = 0 : i64, scratch_operands = 0 : i64, tpu.core_type = #tpu.core_type<tc>} {
    %c0 = arith.constant 0 : index
    %c0_0 = arith.constant 0 : index
    %0 = vector.load %arg0[%c0, %c0_0] : memref<3x3xf32, #tpu.memory_space<vmem>>, vector<3x3xf32>
    %c0_1 = arith.constant 0 : index
    %c0_2 = arith.constant 0 : index
    %1 = vector.load %arg1[%c0_1, %c0_2] : memref<3x3xf32, #tpu.memory_space<vmem>>, vector<3x3xf32>
    %2 = arith.addf %0, %1 : vector<3x3xf32>
    %c0_3 = arith.constant 0 : index
    %c0_4 = arith.constant 0 : index
    %3 = vector.load %arg2[%c0_3, %c0_4] : memref<3x3xf32, #tpu.memory_space<vmem>>, vector<3x3xf32>
    tpu.vector_store %arg2[%c0_3, %c0_4], %2 {strides = array<i32>} : memref<3x3xf32, #tpu.memory_space<vmem>>, vector<3x3xf32>,
    return
  }
}

</mosaic_0001>

<llo_original>
// kernel: tpu_custom_call.1
$region0: #{tpu_custom_call.1}
  #allocation0 [shape = 'u32[]', space=smem, size = 0x4, offset = 0x4, fixed_abs, tag = 'smem constant byte address 0x4 - core index']
  #allocation1 [shape = 'u32[144,128]{1,0:T(1,128)}', space=vmem, size = 0x12000, scoped, tag = 'internal scratch']
  %s0 = inlined_call_operand.hbm [shape: f32[3,3], index: 0, kind: input, shape index: {}]
  %s1 = inlined_call_operand.hbm [shape: f32[3,3], index: 1, kind: input, shape index: {}]
  %s2 = inlined_call_operand.hbm [shape: f32[3,3], index: 2, kind: output, shape index: {}]
  %s3 = sld [smem:[#allocation0]]
  $region26: #{tpu_custom_call.1} parent=0
    _
  %s5 = ssub.s32 1, %s3
  %s6 = scalar_select 0, %s5, %s3
  $region1: #{tpu_custom_call.1} parent=0
    #allocation2 [shape = 'u8[2048]{0}', space=vmem, size = 0x800, scoped, tag = 'input window, operand 0, single buffered']
    #allocation3 [shape = 's32[1]{0}', space=sflag, size = 0x4, scoped, tag = 'scoped memory for tpu_custom_call.1']
    #allocation4 [shape = 's32[1]{0}', space=sflag, size = 0x4, scoped, tag = 'scoped memory for tpu_custom_call.1']
    #allocation5 [shape = 'u8[2048]{0}', space=vmem, size = 0x800, scoped, tag = 'input window, operand 1, single buffered']
    #allocation6 [shape = 's32[1]{0}', space=sflag, size = 0x4, scoped, tag = 'scoped memory for tpu_custom_call.1']
    #allocation7 [shape = 'u8[2048]{0}', space=vmem, size = 0x800, scoped, tag = 'output window, operand 0, single buffered']
    %7 = vsyncpa [#allocation3], 0
    %8 = vsyncpa [#allocation6], 0
    %9 = vsyncpa [#allocation4], 0
    // Predicated region
    $region2: #{tpu_custom_call.1} parent=1 // pred_check
      _
    $region3: #{tpu_custom_call.1} parent=1 // pred_check_branch
      %11 = sbr.rel (0) target = $region5
    $region4: #{tpu_custom_call.1} parent=1 // pred_region
      %s13 = ssub.s32 64, 64
      %14 = vsyncadd [#allocation3], %s13
      %s16 = sshll.u32 [#allocation2], 4
      %s17 = int_to_ptr.vmem [resolvable:$true] %s16
      %19 = dma.hbm_to_vmem [thread:$0]  %s0, 64, %s17, [#allocation3]
    $region5: #{tpu_custom_call.1} parent=1 // pred_fallthru
      _
    // Predicated region
    $region6: #{tpu_custom_call.1} parent=1 // pred_check
      _
    $region7: #{tpu_custom_call.1} parent=1 // pred_check_branch
      %21 = sbr.rel (0) target = $region9
    $region8: #{tpu_custom_call.1} parent=1 // pred_region
      %s23 = ssub.s32 64, 64
      %24 = vsyncadd [#allocation6], %s23
      %s26 = sshll.u32 [#allocation5], 4
      %s27 = int_to_ptr.vmem [resolvable:$true] %s26
      %29 = dma.hbm_to_vmem [thread:$0]  %s1, 64, %s27, [#allocation6]
    $region9: #{tpu_custom_call.1} parent=1 // pred_fallthru
      _
    // Predicated region
    $region10: #{tpu_custom_call.1} parent=1 // pred_check
      _
    $region11: #{tpu_custom_call.1} parent=1 // pred_check_branch
      %31 = sbr.rel (0) target = $region13
    $region12: #{tpu_custom_call.1} parent=1 // pred_region
      %32 = dma.done [#allocation3], 64
    $region13: #{tpu_custom_call.1} parent=1 // pred_fallthru
      _
    // Predicated region
    $region14: #{tpu_custom_call.1} parent=1 // pred_check
      _
    $region15: #{tpu_custom_call.1} parent=1 // pred_check_branch
      %34 = sbr.rel (0) target = $region17
    $region16: #{tpu_custom_call.1} parent=1 // pred_region
      %35 = dma.done [#allocation6], 64
    $region17: #{tpu_custom_call.1} parent=1 // pred_fallthru
      _
    %v36 = vld [vmem:[#allocation2] sm:$0x7]
    %v37 = vld [vmem:[#allocation5] sm:$0x7]
    %v38 = vadd.f32 %v36, %v37
    %vm39 = vcmask 18432
    %40 = vst.msk [vmem:[#allocation7] sm:$0x7] %vm39, %v38
    // Predicated region
    $region18: #{tpu_custom_call.1} parent=1 // pred_check
      _
    $region19: #{tpu_custom_call.1} parent=1 // pred_check_branch
      %42 = sbr.rel (0) target = $region21
    $region20: #{tpu_custom_call.1} parent=1 // pred_region
      %s44 = ssub.s32 64, 64
      %45 = vsyncadd [#allocation4], %s44
      %s47 = sshll.u32 [#allocation7], 4
      %s48 = int_to_ptr.vmem [resolvable:$true] %s47
      %50 = dma.vmem_to_hbm [thread:$0]  %s48, 64, %s2, [#allocation4]
    $region21: #{tpu_custom_call.1} parent=1 // pred_fallthru
      _
    // Predicated region
    $region22: #{tpu_custom_call.1} parent=1 // pred_check
      _
    $region23: #{tpu_custom_call.1} parent=1 // pred_check_branch
      %52 = sbr.rel (0) target = $region25
    $region24: #{tpu_custom_call.1} parent=1 // pred_region
      %53 = dma.done [#allocation4], 64
    $region25: #{tpu_custom_call.1} parent=1 // pred_fallthru
      _
    %54 = vsyncpa [#allocation3], 1
    %55 = vsyncpa [#allocation6], 1
    %56 = vsyncpa [#allocation4], 1

</llo_original>
